<compile_context>
chip_gen: v5e
topology: v5e:2x2
jax: 0.10.0
libtpu: 0.0.40
codegen_flags: <defaults>
</compile_context>

<pallas_src>
import jax
import jax.numpy as jnp
from jax import lax
from jax.experimental import pallas as pl
from jax.experimental.pallas import tpu as pltpu


def _dot_nt(x_tile, w_tile):
    # x_tile: (tm, tk), w_tile: (tn, tk) in native (out, in) layout.
    # Contract on the shared "in" axis -> (tm, tn) == x @ W^T, f32 MXU accumulation.
    return lax.dot_general(
        x_tile, w_tile,
        dimension_numbers=(((1,), (1,)), ((), ())),
        preferred_element_type=jnp.float32)


# ----------------------------- kernels -----------------------------

def _forward_kernel(x_ref, w_ref, o_ref, acc_ref):
    k = pl.program_id(2)
    prod = _dot_nt(x_ref[...], w_ref[...])

    @pl.when(k == 0)
    def _first():
        acc_ref[...] = prod          # no zero-fill + add on the first k step

    @pl.when(k > 0)
    def _accumulate():
        acc_ref[...] += prod

    @pl.when(k == pl.num_programs(2) - 1)
    def _finalize():
        o_ref[...] = jax.nn.sigmoid(acc_ref[...]).astype(o_ref.dtype)


def _fused_loss_kernel(x_ref, w_ref, y_ref, psum_ref, acc_ref):
    # Fused matmul + sigmoid + per-tile sum-of-squares.  Each (i, j) tile writes its
    # own partial sum (no cross-tile state), so i / j may be "parallel" (megacore).
    k = pl.program_id(2)
    prod = _dot_nt(x_ref[...], w_ref[...])

    @pl.when(k == 0)
    def _first():
        acc_ref[...] = prod

    @pl.when(k > 0)
    def _accumulate():
        acc_ref[...] += prod

    @pl.when(k == pl.num_programs(2) - 1)
    def _finalize():
        diff = jax.nn.sigmoid(acc_ref[...]) - y_ref[...].astype(jnp.float32)
        psum_ref[0, 0] = jnp.sum(diff * diff)


# ----------------------------- wrapper -----------------------------

def _pick_tile(dim, candidates):
    for c in candidates:
        if dim >= c and dim % c == 0:
            return c
    # Full extent is always a legal block size.
    # TODO(synk): for very large dims not divisible by 128 this falls back to an
    # un-tiled block; pad the array instead if that ever exceeds VMEM.
    return dim


def torch_model_forward(x, w, y=None, *, compute_dtype=jnp.bfloat16,
                        tm=None, tn=None, tk=None):
    """sigmoid(x @ W^T) with W in PyTorch Linear (out, in) layout (bias=False).
    Returns y_pred (B, H) if y is None, else the scalar MSE loss (mean reduction)."""
    B, H = x.shape
    assert w.shape == (H, H), "weight must be (out_features, in_features) = (H, H)"
    out_dtype = x.dtype
    if compute_dtype is not None:
        x = x.astype(compute_dtype)
        w = w.astype(compute_dtype)
    itemsize = jnp.dtype(x.dtype).itemsize
    out_itemsize = jnp.dtype(out_dtype).itemsize

    # Sublane packing: bf16 wants the second-last block dim to be a multiple of 16
    # (32 for int8/fp8); f32 wants 8.  Full extent is always allowed (fallback).
    row_mult = max(8, 32 // itemsize)
    if tm is None:
        tm = _pick_tile(B, tuple(c for c in (512, 256, 128, 64, 32, 16, 8)
                                 if c % row_mult == 0))
    if tn is None:
        tn = _pick_tile(H, (1024, 512, 256, 128))
    if tk is None:
        tk = _pick_tile(H, (1024, 512, 256, 128))
    gm, gn, gk = B // tm, H // tn, H // tk

    x_spec = pl.BlockSpec((tm, tk), lambda i, j, k: (i, k))
    w_spec = pl.BlockSpec((tn, tk), lambda i, j, k: (j, k))   # native (out, in) layout
    o_spec = pl.BlockSpec((tm, tn), lambda i, j, k: (i, j))

    # VMEM footprint: double-buffered x/W (+ y or y_pred tile) + f32 accumulator.
    tail_itemsize = out_itemsize if y is None else jnp.dtype(y.dtype).itemsize
    vmem_need = (2 * ((tm * tk + tn * tk) * itemsize + tm * tn * tail_itemsize)
                 + tm * tn * 4)
    # v7x has only 64 MiB VMEM per TensorCore -> cap at 48 MiB.
    vmem_limit = int(min(48 * 1024 * 1024,
                         max(32 * 1024 * 1024, int(vmem_need * 1.25))))

    flops = 2 * B * H * H
    trans = B * H
    in_bytes = B * H * itemsize + gm * H * H * itemsize   # W streamed gm (==1) times

    if y is None:
        return pl.pallas_call(
            _forward_kernel,
            out_shape=jax.ShapeDtypeStruct((B, H), out_dtype),
            grid_spec=pltpu.PrefetchScalarGridSpec(
                num_scalar_prefetch=0,
                grid=(gm, gn, gk),
                in_specs=[x_spec, w_spec],
                out_specs=o_spec,
                scratch_shapes=[pltpu.VMEM((tm, tn), jnp.float32)],
            ),
            compiler_params=pltpu.CompilerParams(
                dimension_semantics=("parallel", "parallel", "arbitrary"),
                vmem_limit_bytes=vmem_limit),
            cost_estimate=pl.CostEstimate(
                flops=flops, transcendentals=trans,
                bytes_accessed=in_bytes + B * H * out_itemsize),
        )(x, w)

    # Loss path: per-(i, j) partial sums (SMEM blocks), mean finalized in plain JAX.
    # y_pred is NOT written to HBM (the module returns only the scalar loss).
    y_bytes = B * H * jnp.dtype(y.dtype).itemsize
    psum = pl.pallas_call(
        _fused_loss_kernel,
        out_shape=jax.ShapeDtypeStruct((gm, gn), jnp.float32),
        grid_spec=pltpu.PrefetchScalarGridSpec(
            num_scalar_prefetch=0,
            grid=(gm, gn, gk),
            in_specs=[x_spec, w_spec,
                      pl.BlockSpec((tm, tn), lambda i, j, k: (i, j))],
            out_specs=pl.BlockSpec((1, 1), lambda i, j, k: (i, j),
                                   memory_space=pltpu.SMEM),
            scratch_shapes=[pltpu.VMEM((tm, tn), jnp.float32)],
        ),
        compiler_params=pltpu.CompilerParams(
            dimension_semantics=("parallel", "parallel", "arbitrary"),
            vmem_limit_bytes=vmem_limit),
        cost_estimate=pl.CostEstimate(
            flops=flops, transcendentals=trans,
            bytes_accessed=in_bytes + y_bytes + gm * gn * 4),
    )(x, w, y)
    return jnp.sum(psum) * (1.0 / float(B * H))


# ----------------------------- main -----------------------------

if __name__ == "__main__":
    B = 32     # batch
    H = 512    # hidden_size

    key = jax.random.PRNGKey(0)
    kx, ky, kw = jax.random.split(key, 3)

    x = jax.random.normal(kx, (B, H), dtype=jnp.float32)
    y = jax.random.uniform(ky, (B, H), dtype=jnp.float32)
    # deterministic Linear weight init (uniform(-1/sqrt(H), 1/sqrt(H)), like nn.Linear)
    bound = 1.0 / (H ** 0.5)
    w = jax.random.uniform(kw, (H, H), dtype=jnp.float32, minval=-bound, maxval=bound)

    # Small explicit tiles -> grid (2, 2, 2): exercises k-accumulation and the
    # per-(i, j) partial-sum reduction at small shapes.
    y_pred = jax.block_until_ready(torch_model_forward(x, w, tm=16, tn=256, tk=256))
    loss = jax.block_until_ready(torch_model_forward(x, w, y, tm=16, tn=256, tk=256))

    # Also exercise the default auto-tiled path (single-tile grid at these shapes).
    y_pred_auto = jax.block_until_ready(torch_model_forward(x, w))
    loss_auto = jax.block_until_ready(torch_model_forward(x, w, y))

    # reference check in plain JAX (full-precision anchor)
    ref_pred = jax.nn.sigmoid(jnp.dot(x, w.T, precision=jax.lax.Precision.HIGHEST))
    ref_loss = jnp.mean((ref_pred - y) ** 2)
    assert jnp.allclose(y_pred, ref_pred, atol=5e-3), "y_pred mismatch"
    assert jnp.allclose(y_pred_auto, ref_pred, atol=5e-3), "y_pred (auto-tile) mismatch"
    assert jnp.allclose(loss, ref_loss, rtol=1e-2, atol=1e-4), "loss mismatch"
    assert jnp.allclose(loss_auto, ref_loss, rtol=1e-2, atol=1e-4), "loss (auto-tile) mismatch"

    print("KERNEL_OK")
</pallas_src>

<mosaic_0001>
module attributes {stable_mosaic.version = 11 : i64} {
  func.func @_forward_kernel(%arg0: i32, %arg1: i32, %arg2: i32, %arg3: memref<16x256xbf16, #tpu.memory_space<vmem>>, %arg4: memref<256x256xbf16, #tpu.memory_space<vmem>>, %arg5: memref<16x256xf32, #tpu.memory_space<vmem>>, %arg6: memref<16x256xf32, #tpu.memory_space<vmem>>) attributes {dimension_semantics = [#tpu.dimension_semantics<parallel>, #tpu.dimension_semantics<parallel>, #tpu.dimension_semantics<arbitrary>], iteration_bounds = array<i64: 2, 2, 2>, scalar_prefetch = 0 : i64, scratch_operands = 1 : i64, tpu.core_type = #tpu.core_type<tc>, window_params = [{transform_indices = @transform_0, window_bounds = array<i64: 16, 256>}, {transform_indices = @transform_1, window_bounds = array<i64: 256, 256>}, {transform_indices = @transform_2, window_bounds = array<i64: 16, 256>}]} {
    %c0 = arith.constant 0 : index
    %c0_0 = arith.constant 0 : index
    %0 = vector.load %arg3[%c0, %c0_0] : memref<16x256xbf16, #tpu.memory_space<vmem>>, vector<16x256xbf16>
    %c0_1 = arith.constant 0 : index
    %c0_2 = arith.constant 0 : index
    %1 = vector.load %arg4[%c0_1, %c0_2] : memref<256x256xbf16, #tpu.memory_space<vmem>>, vector<256x256xbf16>
    %cst = arith.constant dense<0.000000e+00> : vector<16x256xf32>
    %2 = tpu.matmul %0, %1, %cst {dimension_numbers = #tpu.dot_dimension_numbers<[1], [1], [0], [0], [0, 0, 1, 0], [], []>} : vector<16x256xbf16>, vector<256x256xbf16>, vector<16x256xf32> -> vector<16x256xf32>
    %c0_i32 = arith.constant 0 : i32
    %3 = arith.cmpi eq, %arg2, %c0_i32 : i32
    %4 = arith.extui %3 : i1 to i32
    %c0_i32_3 = arith.constant 0 : i32
    %5 = arith.cmpi ne, %4, %c0_i32_3 : i32
    scf.if %5 {
      %c0_7 = arith.constant 0 : index
      %c0_8 = arith.constant 0 : index
      %12 = vector.load %arg6[%c0_7, %c0_8] : memref<16x256xf32, #tpu.memory_space<vmem>>, vector<16x256xf32>
      tpu.vector_store %arg6[%c0_7, %c0_8], %2 {strides = array<i32>} : memref<16x256xf32, #tpu.memory_space<vmem>>, vector<16x256xf32>,
    } else {
    }
    %c0_i32_4 = arith.constant 0 : i32
    %6 = arith.cmpi sgt, %arg2, %c0_i32_4 : i32
    %7 = arith.extui %6 : i1 to i32
    %c0_i32_5 = arith.constant 0 : i32
    %8 = arith.cmpi ne, %7, %c0_i32_5 : i32
    scf.if %8 {
      %c0_7 = arith.constant 0 : index
      %c0_8 = arith.constant 0 : index
      %12 = vector.load %arg6[%c0_7, %c0_8] : memref<16x256xf32, #tpu.memory_space<vmem>>, vector<16x256xf32>
      %13 = arith.addf %12, %2 : vector<16x256xf32>
      %c0_9 = arith.constant 0 : index
      %c0_10 = arith.constant 0 : index
      %14 = vector.load %arg6[%c0_9, %c0_10] : memref<16x256xf32, #tpu.memory_space<vmem>>, vector<16x256xf32>
      tpu.vector_store %arg6[%c0_9, %c0_10], %13 {strides = array<i32>} : memref<16x256xf32, #tpu.memory_space<vmem>>, vector<16x256xf32>,
    } else {
    }
    %c1_i32 = arith.constant 1 : i32
    %9 = arith.cmpi eq, %arg2, %c1_i32 : i32
    %10 = arith.extui %9 : i1 to i32
    %c0_i32_6 = arith.constant 0 : i32
    %11 = arith.cmpi ne, %10, %c0_i32_6 : i32
    scf.if %11 {
      %c0_7 = arith.constant 0 : index
      %c0_8 = arith.constant 0 : index
      %12 = vector.load %arg6[%c0_7, %c0_8] : memref<16x256xf32, #tpu.memory_space<vmem>>, vector<16x256xf32>
      %13 = arith.negf %12 : vector<16x256xf32>
      %14 = math.exp %13 : vector<16x256xf32>
      %cst_9 = arith.constant 1.000000e+00 : f32
      %15 = vector.broadcast %cst_9 : f32 to vector<16x256xf32>
      %16 = arith.addf %15, %14 : vector<16x256xf32>
      %17 = arith.divf %15, %16 : vector<16x256xf32>
      %c0_10 = arith.constant 0 : index
      %c0_11 = arith.constant 0 : index
      %18 = vector.load %arg5[%c0_10, %c0_11] : memref<16x256xf32, #tpu.memory_space<vmem>>, vector<16x256xf32>
      tpu.vector_store %arg5[%c0_10, %c0_11], %17 {strides = array<i32>} : memref<16x256xf32, #tpu.memory_space<vmem>>, vector<16x256xf32>,
    } else {
    }
    return
  }
  func.func @transform_0(%arg0: i32, %arg1: i32, %arg2: i32) -> (i32, i32) {
    %c0_i32 = arith.constant 0 : i32
    return %arg0, %arg2 : i32, i32
  }
  func.func @transform_1(%arg0: i32, %arg1: i32, %arg2: i32) -> (i32, i32) {
    %c0_i32 = arith.constant 0 : i32
    return %arg1, %arg2 : i32, i32
  }
  func.func @transform_2(%arg0: i32, %arg1: i32, %arg2: i32) -> (i32, i32) {
    %c0_i32 = arith.constant 0 : i32
    return %arg0, %arg1 : i32, i32
  }
}

</mosaic_0001>

<llo_original>
// kernel: tpu_custom_call.1
$region0: #{tpu_custom_call.1}
  #allocation0 [shape = 'u32[]', space=smem, size = 0x4, offset = 0x4, fixed_abs, tag = 'smem constant byte address 0x4 - core index']
  #allocation1 [shape = 'u32[72,128]{1,0:T(1,128)}', space=vmem, size = 0x9000, scoped, tag = 'internal scratch']
  #allocation2 [shape = 'f32[16,256]{1,0:T(8,128)}', space=vmem, size = 0x4000, scoped, tag = 'scratch operand']
  %s0 = inlined_call_operand.hbm [shape: bf16[32,512], index: 0, kind: input, shape index: {}]
  %s1 = inlined_call_operand.hbm [shape: bf16[512,512], index: 1, kind: input, shape index: {}]
  %s2 = inlined_call_operand.hbm [shape: f32[32,512], index: 2, kind: output, shape index: {}]
  %s3 = sld [smem:[#allocation0]]
  $region61: #{tpu_custom_call.1} parent=0
    _
  %s5 = ssub.s32 1, %s3
  %s6 = scalar_select 0, %s5, %s3
  $region1: #{tpu_custom_call.1} parent=0
    #allocation3 [shape = 'u8[16384]{0}', space=vmem, size = 0x4000, scoped, tag = 'input window, operand 0']
    #allocation4 [shape = 's32[2]{0}', space=sflag, size = 0x8, scoped, tag = 'scoped memory for tpu_custom_call.1']
    #allocation5 [shape = 's32[2]{0}', space=sflag, size = 0x8, scoped, tag = 'scoped memory for tpu_custom_call.1']
    #allocation6 [shape = 'u8[262144]{0}', space=vmem, size = 0x40000, scoped, tag = 'input window, operand 1']
    #allocation7 [shape = 's32[2]{0}', space=sflag, size = 0x8, scoped, tag = 'scoped memory for tpu_custom_call.1']
    #allocation8 [shape = 'u8[32768]{0}', space=vmem, size = 0x8000, scoped, tag = 'output window, operand 0']
    %7 = vsyncpa [#allocation4], 0
    %s8 = scalar_lea.sflag [#allocation4], 1
    %9 = vsyncpa %s8, 0
    %10 = vsyncpa [#allocation7], 0
    %s11 = scalar_lea.sflag [#allocation7], 1
    %12 = vsyncpa %s11, 0
    %13 = vsyncpa [#allocation5], 0
    %s14 = scalar_lea.sflag [#allocation5], 1
    %15 = vsyncpa %s14, 0
    loop: start=0, step=1, limit=10
    $region2: #{tpu_custom_call.1} parent=1 // loop_pre_header
      _
    $region3: #{tpu_custom_call.1} parent=1 // loop_header
      %s17 = sphi 0, %s21
      %p18 = scmp.ge.s32.totalorder %s17, 10
      %s24 = sphi 0, %s43
      %s25 = sphi 0, %s39
      %s26 = sphi 0, %s35
      %s27 = sphi 0, %s24
      %s28 = sphi 0, %s25
      %s29 = sphi 0, %s26
      %s30 = sphi 0, %s27
      %s31 = sphi 0, %s28
      %s32 = sphi 0, %s29
      %s48 = sphi 0, %s50
      %s51 = sphi 0, %s48
      %s52 = sphi 0, %s51
      %s68 = sphi 0, %s52
      %s76 = sphi 0, %s78
      %s79 = sphi 0, %s76
      %s80 = sphi 0, %s79
      %s96 = sphi 0, %s80
      %s104 = sphi 0, %s106
      %s107 = sphi 0, %s104
      %s108 = sphi 0, %s107
      %s124 = sphi 0, %s108
    $region4: #{tpu_custom_call.1} parent=1 // loop_header_branch
      %20 = sbr.rel (%p18) target = $region8
    $region5: #{tpu_custom_call.1} parent=1 // loop_body
      %s22 = ssub.s32 %s17, 1
      %s23 = ssub.s32 %s17, 2
      %s33 = sadd.s32 1, %s26
      %p34 = scmp.ge.s32.totalorder %s33, 2
      %s35 = scalar_select %p34, 0, %s33
      %s36 = sadd.s32 1, %s25
      %s37 = scalar_select %p34, %s36, %s25
      %p38 = scmp.ge.s32.totalorder %s37, 2
      %s39 = scalar_select %p38, 0, %s37
      %s40 = sadd.s32 1, %s24
      %s41 = scalar_select %p38, %s40, %s24
      %p42 = scmp.ge.s32.totalorder %s41, 2
      %s43 = scalar_select %p42, 0, %s41
      %s44 = ssub.s32 %s24, %s43
      %s45 = ssub.s32 %s26, %s35
      %s46 = sor.u32 %s44, %s45
      %p47 = scmp.eq.s32.totalorder %s46, 0
      %s49 = sadd.s32 %s48, 1
      %s50 = scalar_select %p47, %s48, %s49
      %p53 = pneg %p47
      %p54 = scmp.eq.s32.totalorder %s17, 7
      %p55 = por %p53, %p54
      %p56 = scmp.ne.s32.totalorder %s48, %s51
      %p57 = scmp.eq.s32.totalorder %s17, 0
      %p58 = por %p56, %p57
      %p59 = scmp.ne.s32.totalorder %s48, %s51
      %p60 = scmp.eq.s32.totalorder %s22, 7
      %p61 = por %p59, %p60
      %p62 = scmp.ne.s32.totalorder %s51, %s52
      %p63 = scmp.eq.s32.totalorder %s22, 0
      %p64 = por %p62, %p63
      %p65 = scmp.ne.s32.totalorder %s51, %s52
      %p66 = scmp.eq.s32.totalorder %s23, 7
      %p67 = por %p65, %p66
      %p69 = scmp.ne.s32.totalorder %s52, %s68
      %p70 = scmp.eq.s32.totalorder %s23, 0
      %p71 = por %p69, %p70
      %s72 = ssub.s32 %s25, %s39
      %s73 = ssub.s32 %s26, %s35
      %s74 = sor.u32 %s72, %s73
      %p75 = scmp.eq.s32.totalorder %s74, 0
      %s77 = sadd.s32 %s76, 1
      %s78 = scalar_select %p75, %s76, %s77
      %p81 = pneg %p75
      %p82 = scmp.eq.s32.totalorder %s17, 7
      %p83 = por %p81, %p82
      %p84 = scmp.ne.s32.totalorder %s76, %s79
      %p85 = scmp.eq.s32.totalorder %s17, 0
      %p86 = por %p84, %p85
      %p87 = scmp.ne.s32.totalorder %s76, %s79
      %p88 = scmp.eq.s32.totalorder %s22, 7
      %p89 = por %p87, %p88
      %p90 = scmp.ne.s32.totalorder %s79, %s80
      %p91 = scmp.eq.s32.totalorder %s22, 0
      %p92 = por %p90, %p91
      %p93 = scmp.ne.s32.totalorder %s79, %s80
      %p94 = scmp.eq.s32.totalorder %s23, 7
      %p95 = por %p93, %p94
      %p97 = scmp.ne.s32.totalorder %s80, %s96
      %p98 = scmp.eq.s32.totalorder %s23, 0
      %p99 = por %p97, %p98
      %s100 = ssub.s32 %s24, %s43
      %s101 = ssub.s32 %s25, %s39
      %s102 = sor.u32 %s100, %s101
      %p103 = scmp.eq.s32.totalorder %s102, 0
      %s105 = sadd.s32 %s104, 1
      %s106 = scalar_select %p103, %s104, %s105
      %p109 = pneg %p103
      %p110 = scmp.eq.s32.totalorder %s17, 7
      %p111 = por %p109, %p110
      %p112 = scmp.ne.s32.totalorder %s104, %s107
      %p113 = scmp.eq.s32.totalorder %s17, 0
      %p114 = por %p112, %p113
      %p115 = scmp.ne.s32.totalorder %s104, %s107
      %p116 = scmp.eq.s32.totalorder %s22, 7
      %p117 = por %p115, %p116
      %p118 = scmp.ne.s32.totalorder %s107, %s108
      %p119 = scmp.eq.s32.totalorder %s22, 0
      %p120 = por %p118, %p119
      %p121 = scmp.ne.s32.totalorder %s107, %s108
      %p122 = scmp.eq.s32.totalorder %s23, 7
      %p123 = por %p121, %p122
      %p125 = scmp.ne.s32.totalorder %s108, %s124
      %p126 = scmp.eq.s32.totalorder %s23, 0
      %p127 = por %p125, %p126
      %p128 = scmp.le.s32.totalorder 1, %s17
      %p129 = scmp.lt.s32.totalorder %s17, 9
      %p130 = pnand %p128, %p129
      %p131 = pneg %p130
      // Predicated region
      $region9: #{tpu_custom_call.1} parent=5 // pred_check
        _
      $region10: #{tpu_custom_call.1} parent=5 // pred_check_branch
        %133 = sbr.rel (%p130) target = $region12
      $region11: #{tpu_custom_call.1} parent=5 // pred_region
        %s134 = ssub.s32 %s17, 1
      $region12: #{tpu_custom_call.1} parent=5 // pred_fallthru
        _
      %p135 = scmp.lt.s32.totalorder %s17, 8
      // Predicated region
      $region13: #{tpu_custom_call.1} parent=5 // pred_check
        %p136 = pneg %p135
      $region14: #{tpu_custom_call.1} parent=5 // pred_check_branch
        %138 = sbr.rel (%p136) target = $region16
      $region15: #{tpu_custom_call.1} parent=5 // pred_region
        // Predicated region
        $region17: #{tpu_custom_call.1} parent=15 // pred_check
          %p139 = pneg %p58
        $region18: #{tpu_custom_call.1} parent=15 // pred_check_branch
          %141 = sbr.rel (%p139) target = $region20
        $region19: #{tpu_custom_call.1} parent=15 // pred_region
          %s142 = sand.u32 %s48, 1
          %s143 = scalar_lea.sflag [#allocation4], %s142
          %s144 = sand.u32 %s48, 1
          %s145 = smul.addr %s144, 16
          %s146 = scalar_lea.vmem [#allocation3], %s145
          %s147 = smul.u32 2, %s24
          %s148 = smul.u32 2, %s26
          %150 = vsyncadd %s143, 0
          %s151 = smul.addr %s147, 4
          %s152 = sadd.s32 %s148, %s151
          %s153 = smul.addr %s152, 4
          %s154 = scalar_lea.hbm %s0, %s153
          %s155 = sshll.u32 %s154, 4
          %s156 = int_to_ptr.hbm [resolvable:$true] %s155
          %s157 = sshll.u32 %s146, 4
          %s158 = int_to_ptr.vmem [resolvable:$true] %s157
          %163 = dma.hbm_to_vmem [thread:$0]  %s156, 256, %s158, %s143, 256, 128, 8
        $region20: #{tpu_custom_call.1} parent=15 // pred_fallthru
          _
        // Predicated region
        $region21: #{tpu_custom_call.1} parent=15 // pred_check
          %p164 = pneg %p86
        $region22: #{tpu_custom_call.1} parent=15 // pred_check_branch
          %166 = sbr.rel (%p164) target = $region24
        $region23: #{tpu_custom_call.1} parent=15 // pred_region
          %s167 = sand.u32 %s76, 1
          %s168 = scalar_lea.sflag [#allocation7], %s167
          %s169 = sand.u32 %s76, 1
          %s170 = smul.addr %s169, 256
          %s171 = scalar_lea.vmem [#allocation6], %s170
          %s172 = smul.u32 32, %s25
          %s173 = smul.u32 2, %s26
          %175 = vsyncadd %s168, 0
          %s176 = smul.addr %s172, 4
          %s177 = sadd.s32 %s173, %s176
          %s178 = smul.addr %s177, 4
          %s179 = scalar_lea.hbm %s1, %s178
          %s180 = sshll.u32 %s179, 4
          %s181 = int_to_ptr.hbm [resolvable:$true] %s180
          %s182 = sshll.u32 %s171, 4
          %s183 = int_to_ptr.vmem [resolvable:$true] %s182
          %188 = dma.hbm_to_vmem [thread:$0]  %s181, 4096, %s183, %s168, 256, 128, 8
        $region24: #{tpu_custom_call.1} parent=15 // pred_fallthru
          _
      $region16: #{tpu_custom_call.1} parent=5 // pred_fallthru
        _
      %p189 = scmp.le.s32.totalorder 1, %s17
      %p190 = scmp.lt.s32.totalorder %s17, 9
      %p191 = pnand %p189, %p190
      %p192 = pneg %p191
      // Predicated region
      $region25: #{tpu_custom_call.1} parent=5 // pred_check
        _
      $region26: #{tpu_custom_call.1} parent=5 // pred_check_branch
        %194 = sbr.rel (%p191) target = $region28
      $region27: #{tpu_custom_call.1} parent=5 // pred_region
        %s195 = ssub.s32 %s17, 1
        %s196 = sand.u32 %s51, 1
        %s197 = scalar_lea.sflag [#allocation4], %s196
        %s198 = sand.u32 %s51, 1
        %s199 = smul.addr %s198, 16
        %s200 = scalar_lea.vmem [#allocation3], %s199
        // Predicated region
        $region29: #{tpu_custom_call.1} parent=27 // pred_check
          %p201 = pneg %p64
        $region30: #{tpu_custom_call.1} parent=27 // pred_check_branch
          %203 = sbr.rel (%p201) target = $region32
        $region31: #{tpu_custom_call.1} parent=27 // pred_region
          %205 = dma.done %s197, 256
        $region32: #{tpu_custom_call.1} parent=27 // pred_fallthru
          _
        %s206 = sand.u32 %s79, 1
        %s207 = scalar_lea.sflag [#allocation7], %s206
        %s208 = sand.u32 %s79, 1
        %s209 = smul.addr %s208, 256
        %s210 = scalar_lea.vmem [#allocation6], %s209
        // Predicated region
        $region33: #{tpu_custom_call.1} parent=27 // pred_check
          %p211 = pneg %p92
        $region34: #{tpu_custom_call.1} parent=27 // pred_check_branch
          %213 = sbr.rel (%p211) target = $region36
        $region35: #{tpu_custom_call.1} parent=27 // pred_region
          %215 = dma.done %s207, 4096
        $region36: #{tpu_custom_call.1} parent=27 // pred_fallthru
          _
        %s216 = sand.u32 %s51, 1
        %s217 = scalar_lea.sflag [#allocation4], %s216
        %s218 = sand.u32 %s51, 1
        %s219 = smul.addr %s218, 16
        %s220 = scalar_lea.vmem [#allocation3], %s219
        %p221 = pneg %p64
        %p222 = pneg %p61
        %s223 = sand.u32 %s79, 1
        %s224 = scalar_lea.sflag [#allocation7], %s223
        %s225 = sand.u32 %s79, 1
        %s226 = smul.addr %s225, 256
        %s227 = scalar_lea.vmem [#allocation6], %s226
        %p228 = pneg %p92
        %p229 = pneg %p89
        %p230 = pneg %p120
        %p231 = pneg %p117
        %s232 = sand.u32 %s107, 1
        %s233 = scalar_lea.sflag [#allocation5], %s232
        %s234 = sand.u32 %s107, 1
        %s235 = smul.addr %s234, 32
        %s236 = scalar_lea.vmem [#allocation8], %s235
        %s237 = smul.u32 2, %s27
        %s238 = smul.u32 2, %s29
        %s239 = smul.u32 32, %s28
        %s240 = smul.u32 2, %s29
        %s241 = smul.u32 2, %s27
        %s242 = smul.u32 2, %s28
        %v243 = vld [vmem:[%s200] sm:$0xff]
        %v244 = vld [vmem:[%s200 + $0x8] sm:$0xff]
        %v245 = vld [vmem:[%s210] sm:$0xff]
        %v246 = vld [vmem:[%s210 + $0x8] sm:$0xff]
        %v247 = vld [vmem:[%s210 + $0x10] sm:$0xff]
        %v248 = vld [vmem:[%s210 + $0x18] sm:$0xff]
        %v249 = vld [vmem:[%s210 + $0x20] sm:$0xff]
        %v250 = vld [vmem:[%s210 + $0x28] sm:$0xff]
        %v251 = vld [vmem:[%s210 + $0x30] sm:$0xff]
        %v252 = vld [vmem:[%s210 + $0x38] sm:$0xff]
        %v253 = vld [vmem:[%s210 + $0x40] sm:$0xff]
        %v254 = vld [vmem:[%s210 + $0x48] sm:$0xff]
        %v255 = vld [vmem:[%s210 + $0x50] sm:$0xff]
        %v256 = vld [vmem:[%s210 + $0x58] sm:$0xff]
        %v257 = vld [vmem:[%s210 + $0x60] sm:$0xff]
        %v258 = vld [vmem:[%s210 + $0x68] sm:$0xff]
        %v259 = vld [vmem:[%s210 + $0x70] sm:$0xff]
        %v260 = vld [vmem:[%s210 + $0x78] sm:$0xff]
        %v261 = vld [vmem:[%s210 + $0x80] sm:$0xff]
        %v262 = vld [vmem:[%s210 + $0x88] sm:$0xff]
        %v263 = vld [vmem:[%s210 + $0x90] sm:$0xff]
        %v264 = vld [vmem:[%s210 + $0x98] sm:$0xff]
        %v265 = vld [vmem:[%s210 + $0xa0] sm:$0xff]
        %v266 = vld [vmem:[%s210 + $0xa8] sm:$0xff]
        %v267 = vld [vmem:[%s210 + $0xb0] sm:$0xff]
        %v268 = vld [vmem:[%s210 + $0xb8] sm:$0xff]
        %v269 = vld [vmem:[%s210 + $0xc0] sm:$0xff]
        %v270 = vld [vmem:[%s210 + $0xc8] sm:$0xff]
        %v271 = vld [vmem:[%s210 + $0xd0] sm:$0xff]
        %v272 = vld [vmem:[%s210 + $0xd8] sm:$0xff]
        %v273 = vld [vmem:[%s210 + $0xe0] sm:$0xff]
        %v274 = vld [vmem:[%s210 + $0xe8] sm:$0xff]
        %v275 = vld [vmem:[%s210 + $0xf0] sm:$0xff]
        %v276 = vld [vmem:[%s210 + $0xf8] sm:$0xff]
        %v279 = vunpack.c.l.b16 %v243
        %v280 = vunpack.c.h.b16 %v243
        %v281 = vunpack.c.l.b16 %v244
        %v282 = vunpack.c.h.b16 %v244
        %v283 = vpack.c.b16 %v281, %v279
        %v284 = vpack.c.b16 %v282, %v280
        %v319 = vunpack.c.l.b16 %v245
        %v320 = vunpack.c.h.b16 %v245
        %v321 = vunpack.c.l.b16 %v246
        %v322 = vunpack.c.h.b16 %v246
        %v323 = vunpack.c.l.b16 %v247
        %v324 = vunpack.c.h.b16 %v247
        %v325 = vunpack.c.l.b16 %v248
        %v326 = vunpack.c.h.b16 %v248
        %v327 = vunpack.c.l.b16 %v249
        %v328 = vunpack.c.h.b16 %v249
        %v329 = vunpack.c.l.b16 %v250
        %v330 = vunpack.c.h.b16 %v250
        %v331 = vunpack.c.l.b16 %v251
        %v332 = vunpack.c.h.b16 %v251
        %v333 = vunpack.c.l.b16 %v252
        %v334 = vunpack.c.h.b16 %v252
        %v335 = vunpack.c.l.b16 %v253
        %v336 = vunpack.c.h.b16 %v253
        %v337 = vunpack.c.l.b16 %v254
        %v338 = vunpack.c.h.b16 %v254
        %v339 = vunpack.c.l.b16 %v255
        %v340 = vunpack.c.h.b16 %v255
        %v341 = vunpack.c.l.b16 %v256
        %v342 = vunpack.c.h.b16 %v256
        %v343 = vunpack.c.l.b16 %v257
        %v344 = vunpack.c.h.b16 %v257
        %v345 = vunpack.c.l.b16 %v258
        %v346 = vunpack.c.h.b16 %v258
        %v347 = vunpack.c.l.b16 %v259
        %v348 = vunpack.c.h.b16 %v259
        %v349 = vunpack.c.l.b16 %v260
        %v350 = vunpack.c.h.b16 %v260
        %v351 = vunpack.c.l.b16 %v261
        %v352 = vunpack.c.h.b16 %v261
        %v353 = vunpack.c.l.b16 %v262
        %v354 = vunpack.c.h.b16 %v262
        %v355 = vunpack.c.l.b16 %v263
        %v356 = vunpack.c.h.b16 %v263
        %v357 = vunpack.c.l.b16 %v264
        %v358 = vunpack.c.h.b16 %v264
        %v359 = vunpack.c.l.b16 %v265
        %v360 = vunpack.c.h.b16 %v265
        %v361 = vunpack.c.l.b16 %v266
        %v362 = vunpack.c.h.b16 %v266
        %v363 = vunpack.c.l.b16 %v267
        %v364 = vunpack.c.h.b16 %v267
        %v365 = vunpack.c.l.b16 %v268
        %v366 = vunpack.c.h.b16 %v268
        %v367 = vunpack.c.l.b16 %v269
        %v368 = vunpack.c.h.b16 %v269
        %v369 = vunpack.c.l.b16 %v270
        %v370 = vunpack.c.h.b16 %v270
        %v371 = vunpack.c.l.b16 %v271
        %v372 = vunpack.c.h.b16 %v271
        %v373 = vunpack.c.l.b16 %v272
        %v374 = vunpack.c.h.b16 %v272
        %v375 = vunpack.c.l.b16 %v273
        %v376 = vunpack.c.h.b16 %v273
        %v377 = vunpack.c.l.b16 %v274
        %v378 = vunpack.c.h.b16 %v274
        %v379 = vunpack.c.l.b16 %v275
        %v380 = vunpack.c.h.b16 %v275
        %v381 = vunpack.c.l.b16 %v276
        %v382 = vunpack.c.h.b16 %v276
        %v383 = vpack.c.b16 %v321, %v319
        %v384 = vpack.c.b16 %v322, %v320
        %v385 = vpack.c.b16 %v325, %v323
        %v386 = vpack.c.b16 %v326, %v324
        %v387 = vpack.c.b16 %v329, %v327
        %v388 = vpack.c.b16 %v330, %v328
        %v389 = vpack.c.b16 %v333, %v331
        %v390 = vpack.c.b16 %v334, %v332
        %v391 = vpack.c.b16 %v337, %v335
        %v392 = vpack.c.b16 %v338, %v336
        %v393 = vpack.c.b16 %v341, %v339
        %v394 = vpack.c.b16 %v342, %v340
        %v395 = vpack.c.b16 %v345, %v343
        %v396 = vpack.c.b16 %v346, %v344
        %v397 = vpack.c.b16 %v349, %v347
        %v398 = vpack.c.b16 %v350, %v348
        %v399 = vpack.c.b16 %v353, %v351
        %v400 = vpack.c.b16 %v354, %v352
        %v401 = vpack.c.b16 %v357, %v355
        %v402 = vpack.c.b16 %v358, %v356
        %v403 = vpack.c.b16 %v361, %v359
        %v404 = vpack.c.b16 %v362, %v360
        %v405 = vpack.c.b16 %v365, %v363
        %v406 = vpack.c.b16 %v366, %v364
        %v407 = vpack.c.b16 %v369, %v367
        %v408 = vpack.c.b16 %v370, %v368
        %v409 = vpack.c.b16 %v373, %v371
        %v410 = vpack.c.b16 %v374, %v372
        %v411 = vpack.c.b16 %v377, %v375
        %v412 = vpack.c.b16 %v378, %v376
        %v413 = vpack.c.b16 %v381, %v379
        %v414 = vpack.c.b16 %v382, %v380
        %447 = vmatpush.bf16.xpose.msra.mxu0 %v397
        %448 = vmatpush.bf16.xpose.msra.mxu0 %v395
        %449 = vmatpush.bf16.xpose.msra.mxu0 %v393
        %450 = vmatpush.bf16.xpose.msra.mxu0 %v391
        %451 = vmatpush.bf16.xpose.msra.mxu0 %v389
        %452 = vmatpush.bf16.xpose.msra.mxu0 %v387
        %453 = vmatpush.bf16.xpose.msra.mxu0 %v385
        %454 = vmatpush.bf16.xpose.msra.mxu0 %v383
        %455 = vmatmul.bf16.gmra.mxu0 %v283
        %v456 = vpop.f32.mrf.mxu0
        %v457 = vadd.f32 0.0, %v456
        %v458 = vpop.f32.mrf.mxu0
        %v459 = vadd.f32 0.0, %v458
        %460 = vdwg.mxu0
        %461 = vmatpush.bf16.xpose.msra.mxu0 %v398
        %462 = vmatpush.bf16.xpose.msra.mxu0 %v396
        %463 = vmatpush.bf16.xpose.msra.mxu0 %v394
        %464 = vmatpush.bf16.xpose.msra.mxu0 %v392
        %465 = vmatpush.bf16.xpose.msra.mxu0 %v390
        %466 = vmatpush.bf16.xpose.msra.mxu0 %v388
        %467 = vmatpush.bf16.xpose.msra.mxu0 %v386
        %468 = vmatpush.bf16.xpose.msra.mxu0 %v384
        %469 = vmatmul.bf16.gmra.mxu0 %v284
        %v470 = vpop.f32.mrf.mxu0
        %v471 = vadd.f32 %v457, %v470
        %v472 = vpop.f32.mrf.mxu0
        %v473 = vadd.f32 %v459, %v472
        %474 = vdwg.mxu0
        %475 = vmatpush.bf16.xpose.msra.mxu0 %v413
        %476 = vmatpush.bf16.xpose.msra.mxu0 %v411
        %477 = vmatpush.bf16.xpose.msra.mxu0 %v409
        %478 = vmatpush.bf16.xpose.msra.mxu0 %v407
        %479 = vmatpush.bf16.xpose.msra.mxu0 %v405
        %480 = vmatpush.bf16.xpose.msra.mxu0 %v403
        %481 = vmatpush.bf16.xpose.msra.mxu0 %v401
        %482 = vmatpush.bf16.xpose.msra.mxu0 %v399
        %483 = vmatmul.bf16.gmra.mxu0 %v283
        %v484 = vpop.f32.mrf.mxu0
        %v485 = vadd.f32 0.0, %v484
        %v486 = vpop.f32.mrf.mxu0
        %v487 = vadd.f32 0.0, %v486
        %488 = vdwg.mxu0
        %489 = vmatpush.bf16.xpose.msra.mxu0 %v414
        %490 = vmatpush.bf16.xpose.msra.mxu0 %v412
        %491 = vmatpush.bf16.xpose.msra.mxu0 %v410
        %492 = vmatpush.bf16.xpose.msra.mxu0 %v408
        %493 = vmatpush.bf16.xpose.msra.mxu0 %v406
        %494 = vmatpush.bf16.xpose.msra.mxu0 %v404
        %495 = vmatpush.bf16.xpose.msra.mxu0 %v402
        %496 = vmatpush.bf16.xpose.msra.mxu0 %v400
        %497 = vmatmul.bf16.gmra.mxu0 %v284
        %v498 = vpop.f32.mrf.mxu0
        %v499 = vadd.f32 %v485, %v498
        %v500 = vpop.f32.mrf.mxu0
        %v501 = vadd.f32 %v487, %v500
        %502 = vdwg.mxu0
        %p503 = scmp.eq.s32.totalorder %s29, 0
        // Predicated region
        $region37: #{tpu_custom_call.1} parent=27 // pred_check
          %p504 = pneg %p503
        $region38: #{tpu_custom_call.1} parent=27 // pred_check_branch
          %506 = sbr.rel (%p504) target = $region40
        $region39: #{tpu_custom_call.1} parent=27 // pred_region
          %507 = vst [vmem:[#allocation2] sm:$0xff] %v471
          %508 = vst [vmem:[#allocation2 + $0x8] sm:$0xff] %v499
          %509 = vst [vmem:[#allocation2 + $0x10] sm:$0xff] %v473
          %510 = vst [vmem:[#allocation2 + $0x18] sm:$0xff] %v501
        $region40: #{tpu_custom_call.1} parent=27 // pred_fallthru
          _
        %p511 = scmp.gt.s32.totalorder %s29, 0
        // Predicated region
        $region41: #{tpu_custom_call.1} parent=27 // pred_check
          %p512 = pneg %p511
        $region42: #{tpu_custom_call.1} parent=27 // pred_check_branch
          %514 = sbr.rel (%p512) target = $region44
        $region43: #{tpu_custom_call.1} parent=27 // pred_region
          %v515 = vld [vmem:[#allocation2] sm:$0xff]
          %v516 = vld [vmem:[#allocation2 + $0x8] sm:$0xff]
          %v517 = vld [vmem:[#allocation2 + $0x10] sm:$0xff]
          %v518 = vld [vmem:[#allocation2 + $0x18] sm:$0xff]
          %v519 = vadd.f32 %v515, %v471
          %v520 = vadd.f32 %v516, %v499
          %v521 = vadd.f32 %v517, %v473
          %v522 = vadd.f32 %v518, %v501
          %523 = vst [vmem:[#allocation2] sm:$0xff] %v519
          %524 = vst [vmem:[#allocation2 + $0x8] sm:$0xff] %v520
          %525 = vst [vmem:[#allocation2 + $0x10] sm:$0xff] %v521
          %526 = vst [vmem:[#allocation2 + $0x18] sm:$0xff] %v522
        $region44: #{tpu_custom_call.1} parent=27 // pred_fallthru
          _
        %p527 = scmp.eq.s32.totalorder %s29, 1
        // Predicated region
        $region45: #{tpu_custom_call.1} parent=27 // pred_check
          %p528 = pneg %p527
        $region46: #{tpu_custom_call.1} parent=27 // pred_check_branch
          %530 = sbr.rel (%p528) target = $region48
        $region47: #{tpu_custom_call.1} parent=27 // pred_region
          %v531 = vld [vmem:[#allocation2] sm:$0xff]
          %v532 = vld [vmem:[#allocation2 + $0x8] sm:$0xff]
          %v533 = vld [vmem:[#allocation2 + $0x10] sm:$0xff]
          %v534 = vld [vmem:[#allocation2 + $0x18] sm:$0xff]
          %v535 = vxor.u32 %v531, 2147483648
          %v536 = vxor.u32 %v532, 2147483648
          %v537 = vxor.u32 %v533, 2147483648
          %v538 = vxor.u32 %v534, 2147483648
          %v539 = vmul.f32 %v535, 1.442695
          %v540 = vpow.pop %v539
          %v541 = vmul.f32 %v536, 1.442695
          %v542 = vpow.pop %v541
          %v543 = vmul.f32 %v537, 1.442695
          %v544 = vpow.pop %v543
          %v545 = vmul.f32 %v538, 1.442695
          %v546 = vpow.pop %v545
          %v547 = vadd.f32 %v540, 1.0
          %v548 = vadd.f32 %v542, 1.0
          %v549 = vadd.f32 %v544, 1.0
          %v550 = vadd.f32 %v546, 1.0
          %v551 = vrcp.pop %v547
          %v552 = vmul.f32 %v547, %v551
          %v553 = vsub.f32 1.0, %v552
          %v554 = vmul.f32 %v551, %v553
          %v555 = vadd.f32 %v551, %v554
          %vm556 = vweird.f32 %v547
          %vm557 = vweird.f32 %v551
          %vm558 = vmor %vm556, %vm557
          %v559 = vsel %vm558, %v551, %v555
          %v560 = vand.u32 2147483647, %v547
          %vm561 = vcmp.eq.f32.partialorder %v560, 8.507059e+37
          %v562 = vand.u32 %v547, 2147483648
          %v563 = vor.u32 1.1754944e-38, %v562
          %v564 = vsel %vm561, %v563, %v559
          %v565 = vmul.f32 1.0, %v564
          %v566 = vrcp.pop %v548
          %v567 = vmul.f32 %v548, %v566
          %v568 = vsub.f32 1.0, %v567
          %v569 = vmul.f32 %v566, %v568
          %v570 = vadd.f32 %v566, %v569
          %vm571 = vweird.f32 %v548
          %vm572 = vweird.f32 %v566
          %vm573 = vmor %vm571, %vm572
          %v574 = vsel %vm573, %v566, %v570
          %v575 = vand.u32 2147483647, %v548
          %vm576 = vcmp.eq.f32.partialorder %v575, 8.507059e+37
          %v577 = vand.u32 %v548, 2147483648
          %v578 = vor.u32 1.1754944e-38, %v577
          %v579 = vsel %vm576, %v578, %v574
          %v580 = vmul.f32 1.0, %v579
          %v581 = vrcp.pop %v549
          %v582 = vmul.f32 %v549, %v581
          %v583 = vsub.f32 1.0, %v582
          %v584 = vmul.f32 %v581, %v583
          %v585 = vadd.f32 %v581, %v584
          %vm586 = vweird.f32 %v549
          %vm587 = vweird.f32 %v581
          %vm588 = vmor %vm586, %vm587
          %v589 = vsel %vm588, %v581, %v585
          %v590 = vand.u32 2147483647, %v549
          %vm591 = vcmp.eq.f32.partialorder %v590, 8.507059e+37
          %v592 = vand.u32 %v549, 2147483648
          %v593 = vor.u32 1.1754944e-38, %v592
          %v594 = vsel %vm591, %v593, %v589
          %v595 = vmul.f32 1.0, %v594
          %v596 = vrcp.pop %v550
          %v597 = vmul.f32 %v550, %v596
          %v598 = vsub.f32 1.0, %v597
          %v599 = vmul.f32 %v596, %v598
          %v600 = vadd.f32 %v596, %v599
          %vm601 = vweird.f32 %v550
          %vm602 = vweird.f32 %v596
          %vm603 = vmor %vm601, %vm602
          %v604 = vsel %vm603, %v596, %v600
          %v605 = vand.u32 2147483647, %v550
          %vm606 = vcmp.eq.f32.partialorder %v605, 8.507059e+37
          %v607 = vand.u32 %v550, 2147483648
          %v608 = vor.u32 1.1754944e-38, %v607
          %v609 = vsel %vm606, %v608, %v604
          %v610 = vmul.f32 1.0, %v609
          %611 = vst [vmem:[%s236] sm:$0xff] %v565
          %612 = vst [vmem:[%s236 + $0x8] sm:$0xff] %v580
          %613 = vst [vmem:[%s236 + $0x10] sm:$0xff] %v595
          %614 = vst [vmem:[%s236 + $0x18] sm:$0xff] %v610
        $region48: #{tpu_custom_call.1} parent=27 // pred_fallthru
          _
        %s615 = sand.u32 %s107, 1
        %s616 = scalar_lea.sflag [#allocation5], %s615
        %s617 = sand.u32 %s107, 1
        %s618 = smul.addr %s617, 32
        %s619 = scalar_lea.vmem [#allocation8], %s618
        // Predicated region
        $region49: #{tpu_custom_call.1} parent=27 // pred_check
          %p620 = pneg %p117
        $region50: #{tpu_custom_call.1} parent=27 // pred_check_branch
          %622 = sbr.rel (%p620) target = $region52
        $region51: #{tpu_custom_call.1} parent=27 // pred_region
          %s623 = smul.u32 2, %s27
          %s624 = smul.u32 2, %s28
          %626 = vsyncadd %s616, 0
          %s627 = smul.addr %s623, 4
          %s628 = sadd.s32 %s624, %s627
          %s629 = smul.addr %s628, 8
          %s630 = scalar_lea.hbm %s2, %s629
          %s631 = sshll.u32 %s619, 4
          %s632 = int_to_ptr.vmem [resolvable:$true] %s631
          %s633 = sshll.u32 %s630, 4
          %s634 = int_to_ptr.hbm [resolvable:$true] %s633
          %639 = dma.vmem_to_hbm [thread:$0]  %s632, 512, %s634, %s616, 256, 512, 16
        $region52: #{tpu_custom_call.1} parent=27 // pred_fallthru
          _
      $region28: #{tpu_custom_call.1} parent=5 // pred_fallthru
        _
      %p640 = scmp.le.s32.totalorder 2, %s17
      // Predicated region
      $region53: #{tpu_custom_call.1} parent=5 // pred_check
        %p641 = pneg %p640
      $region54: #{tpu_custom_call.1} parent=5 // pred_check_branch
        %643 = sbr.rel (%p641) target = $region56
      $region55: #{tpu_custom_call.1} parent=5 // pred_region
        %s644 = ssub.s32 %s17, 2
        // Predicated region
        $region57: #{tpu_custom_call.1} parent=55 // pred_check
          %p645 = pneg %p123
        $region58: #{tpu_custom_call.1} parent=55 // pred_check_branch
          %647 = sbr.rel (%p645) target = $region60
        $region59: #{tpu_custom_call.1} parent=55 // pred_region
          %s648 = sand.u32 %s108, 1
          %s649 = scalar_lea.sflag [#allocation5], %s648
          %s650 = sand.u32 %s108, 1
          %s651 = smul.addr %s650, 32
          %s652 = scalar_lea.vmem [#allocation8], %s651
          %654 = dma.done %s649, 512
        $region60: #{tpu_custom_call.1} parent=55 // pred_fallthru
          _
      $region56: #{tpu_custom_call.1} parent=5 // pred_fallthru
        _
    $region6: #{tpu_custom_call.1} parent=1 // loop_footer
      %s21 = sadd.s32 1, %s17
    $region7: #{tpu_custom_call.1} parent=1 // loop_footer_branch
      %16 = sbr.rel target = $region3
    $region8: #{tpu_custom_call.1} parent=1 // loop_exit
      _
    %655 = vsyncpa [#allocation4], 1
    %s656 = scalar_lea.sflag [#allocation4], 1
    %657 = vsyncpa %s656, 1
    %658 = vsyncpa [#allocation7], 1
    %s659 = scalar_lea.sflag [#allocation7], 1
    %660 = vsyncpa %s659, 1
    %661 = vsyncpa [#allocation5], 1
    %s662 = scalar_lea.sflag [#allocation5], 1
    %663 = vsyncpa %s662, 1

</llo_original>
